<compile_context>
chip_gen: v7x
topology: tpu7x:2x2x1
jax: 0.10.0
libtpu: 0.0.40
codegen_flags: <defaults>
</compile_context>

<pallas_src>
import jax
import jax.numpy as jnp
from jax.experimental import pallas as pl
from jax.experimental.pallas import tpu as pltpu

BN_EPS = 1e-5
LANES = 128


def conv_stats_kernel(p_ref, w_ref, y_ref, stats_ref):
    # p_ref: (tm, K) bf16 im2col tile, w_ref: (K, Cpad) bf16
    # y_ref: (tm, Cpad) f32 raw conv output, stats_ref: (8, Cpad) f32 (row0=sum, row1=sumsq)
    y = jnp.dot(p_ref[...], w_ref[...], preferred_element_type=jnp.float32)  # MXU, f32 acc
    y_ref[...] = y
    s1 = jnp.sum(y, axis=0, keepdims=True)        # per-channel sum (f32)
    s2 = jnp.sum(y * y, axis=0, keepdims=True)    # per-channel sum of squares (f32)
    stats_ref[...] = jnp.concatenate(
        [s1, s2, jnp.zeros((6, y.shape[1]), jnp.float32)], axis=0)


def bn_relu_kernel(y_ref, scale_ref, shift_ref, o_ref):
    # Fused BN (pre-folded scale/shift) + ReLU: one mul + one add per element.
    o_ref[...] = jnp.maximum(y_ref[...] * scale_ref[...] + shift_ref[...], 0.0)


def conv_bn_relu(x_nchw, w_oihw, gamma, beta, *, tm=1024):
    # Only the module defaults are supported: kernel_size=3, stride=1, padding=1.
    N, Cin, H, W = x_nchw.shape
    Cout, Cin_w, KH, KW = w_oihw.shape
    assert Cin == Cin_w and KH == 3 and KW == 3

    # --- glue: layout + im2col in bf16 (pure data movement) ---
    # TODO(synk): implicit im2col inside the kernel (shifted slabs of padded NHWC x,
    # 9 accumulated dots per tile) would cut input HBM traffic another ~4.5x.
    x_nhwc = jnp.transpose(x_nchw, (0, 2, 3, 1)).astype(jnp.bfloat16)
    x_pad = jnp.pad(x_nhwc, ((0, 0), (1, 1), (1, 1), (0, 0)))
    patches = [x_pad[:, kh:kh + H, kw:kw + W, :] for kh in range(KH) for kw in range(KW)]
    P = jnp.concatenate(patches, axis=-1).reshape(N * H * W, KH * KW * Cin)

    M, K = P.shape
    Cpad = ((Cout + LANES - 1) // LANES) * LANES  # lane-dense output channels

    # Weight matrix (K, Cout) -> zero-padded to (K, Cpad), bf16 for the MXU.
    Wm = jnp.transpose(w_oihw, (2, 3, 1, 0)).reshape(K, Cout)
    Wm = jnp.pad(Wm, ((0, 0), (0, Cpad - Cout))).astype(jnp.bfloat16)

    # Pad M up to a tile multiple with zero rows: they contribute 0 to sum/sumsq,
    # and we divide by the true M, so the batch statistics are unaffected.
    num_tiles = pl.cdiv(M, tm)
    Mpad = num_tiles * tm
    if Mpad != M:
        P = jnp.pad(P, ((0, Mpad - M), (0, 0)))

    cparams = pltpu.CompilerParams(
        dimension_semantics=("parallel",),        # shards M tiles across v7x's 2 TCs
        vmem_limit_bytes=32 * 1024 * 1024,        # ~2x(tm*K*2 + tm*Cpad*4)B << 32 MiB at tm<=2048
    )

    # --- pass 1: conv-as-matmul + per-tile per-channel sum / sumsq ---
    y, stats = pl.pallas_call(
        conv_stats_kernel,
        out_shape=(jax.ShapeDtypeStruct((Mpad, Cpad), jnp.float32),
                   jax.ShapeDtypeStruct((num_tiles * 8, Cpad), jnp.float32)),
        grid=(num_tiles,),
        in_specs=[pl.BlockSpec((tm, K), lambda i: (i, 0)),
                  pl.BlockSpec((K, Cpad), lambda i: (0, 0))],
        out_specs=(pl.BlockSpec((tm, Cpad), lambda i: (i, 0)),
                   pl.BlockSpec((8, Cpad), lambda i: (i, 0))),
        compiler_params=cparams,
    )(P, Wm)

    # --- finalize BN into a single scale/shift (tiny per-channel math, f32) ---
    stats = stats.reshape(num_tiles, 8, Cpad)
    s1 = jnp.sum(stats[:, 0, :], axis=0)
    s2 = jnp.sum(stats[:, 1, :], axis=0)
    mean = s1 / M
    var = jnp.maximum(s2 / M - mean * mean, 0.0)  # biased batch variance (training-mode BN)
    gamma_p = jnp.pad(gamma.astype(jnp.float32), (0, Cpad - Cout))
    beta_p = jnp.pad(beta.astype(jnp.float32), (0, Cpad - Cout))
    scale = (gamma_p * jax.lax.rsqrt(var + BN_EPS)).reshape(1, Cpad)
    shift = (beta_p - mean * scale[0]).reshape(1, Cpad)

    # --- pass 2: fused scale/shift + ReLU over y tiles ---
    out = pl.pallas_call(
        bn_relu_kernel,
        out_shape=jax.ShapeDtypeStruct((Mpad, Cpad), jnp.float32),
        grid=(num_tiles,),
        in_specs=[pl.BlockSpec((tm, Cpad), lambda i: (i, 0)),
                  pl.BlockSpec((1, Cpad), lambda i: (0, 0)),
                  pl.BlockSpec((1, Cpad), lambda i: (0, 0))],
        out_specs=pl.BlockSpec((tm, Cpad), lambda i: (i, 0)),
        compiler_params=cparams,
    )(y, scale, shift)

    # --- glue: strip padding, back to NCHW ---
    out = out[:M, :Cout].reshape(N, H, W, Cout)
    return jnp.transpose(out, (0, 3, 1, 2))


def reference(x_nchw, w_oihw, gamma, beta, *, cast_conv_inputs_to_bf16=True):
    # Pure-JAX reference: conv -> training-mode BN -> ReLU.
    # The Pallas kernel feeds the MXU bf16 operands (f32 accumulation), so the tight
    # comparison rounds the conv inputs to bf16 the same way.
    if cast_conv_inputs_to_bf16:
        x_nchw = x_nchw.astype(jnp.bfloat16).astype(jnp.float32)
        w_oihw = w_oihw.astype(jnp.bfloat16).astype(jnp.float32)
    y = jax.lax.conv_general_dilated(
        x_nchw, w_oihw, window_strides=(1, 1), padding=((1, 1), (1, 1)),
        dimension_numbers=("NCHW", "OIHW", "NCHW"))
    mean = jnp.mean(y, axis=(0, 2, 3), keepdims=True)
    var = jnp.mean((y - mean) ** 2, axis=(0, 2, 3), keepdims=True)
    y = (y - mean) * jax.lax.rsqrt(var + BN_EPS)
    y = y * gamma.reshape(1, -1, 1, 1) + beta.reshape(1, -1, 1, 1)
    return jnp.maximum(y, 0.0)


if __name__ == "__main__":
    key = jax.random.PRNGKey(0)
    k_x, k_w = jax.random.split(key)

    N, Cin, Cout, H, W, KH, KW = 2, 4, 8, 16, 16, 3, 3

    x = jax.random.normal(k_x, (N, Cin, H, W), dtype=jnp.float32)

    # Deterministic param init matching the module's __init__:
    # Conv2d weight: kaiming_normal_ with a=1 => std = 1/sqrt(fan_in)
    fan_in = Cin * KH * KW
    w = jax.random.normal(k_w, (Cout, Cin, KH, KW), dtype=jnp.float32) * (1.0 / jnp.sqrt(fan_in))
    # BatchNorm2d defaults: weight (gamma) = 1, bias (beta) = 0
    gamma = jnp.ones((Cout,), dtype=jnp.float32)
    beta = jnp.zeros((Cout,), dtype=jnp.float32)

    # Small tile so the tiny test exercises the multi-tile (grid > 1) reduction path.
    out = conv_bn_relu(x, w, gamma, beta, tm=128)
    out = jax.block_until_ready(out)
    assert out.shape == (N, Cout, H, W)

    # Tight check vs a reference that rounds conv inputs to bf16 (mirrors the MXU feed).
    ref_bf16 = jax.block_until_ready(reference(x, w, gamma, beta, cast_conv_inputs_to_bf16=True))
    assert jnp.max(jnp.abs(out - ref_bf16)) < 2e-3, "mismatch vs bf16-input JAX reference"

    # Looser sanity check vs the pure-f32 module semantics (bf16 MXU rounding only).
    ref_f32 = jax.block_until_ready(reference(x, w, gamma, beta, cast_conv_inputs_to_bf16=False))
    assert jnp.max(jnp.abs(out - ref_f32)) < 5e-2, "mismatch vs f32 JAX reference"

    print("KERNEL_OK")
</pallas_src>

<mosaic_0001>
module attributes {stable_mosaic.version = 11 : i64} {
  func.func @conv_stats_kernel(%arg0: i32, %arg1: memref<128x36xbf16, #tpu.memory_space<vmem>>, %arg2: memref<36x128xbf16, #tpu.memory_space<vmem>>, %arg3: memref<128x128xf32, #tpu.memory_space<vmem>>, %arg4: memref<8x128xf32, #tpu.memory_space<vmem>>) attributes {dimension_semantics = [#tpu.dimension_semantics<parallel>], iteration_bounds = array<i64: 4>, scalar_prefetch = 0 : i64, scratch_operands = 0 : i64, tpu.core_type = #tpu.core_type<tc>, window_params = [{transform_indices = @transform_0, window_bounds = array<i64: 128, 36>}, {pipeline_mode = #tpu.pipeline_mode<synchronous>, transform_indices = @transform_1, window_bounds = array<i64: 36, 128>}, {transform_indices = @transform_2, window_bounds = array<i64: 128, 128>}, {transform_indices = @transform_3, window_bounds = array<i64: 8, 128>}]} {
    %c0 = arith.constant 0 : index
    %c0_0 = arith.constant 0 : index
    %0 = vector.load %arg1[%c0, %c0_0] : memref<128x36xbf16, #tpu.memory_space<vmem>>, vector<128x36xbf16>
    %c0_1 = arith.constant 0 : index
    %c0_2 = arith.constant 0 : index
    %1 = vector.load %arg2[%c0_1, %c0_2] : memref<36x128xbf16, #tpu.memory_space<vmem>>, vector<36x128xbf16>
    %cst = arith.constant dense<0.000000e+00> : vector<128x128xf32>
    %2 = tpu.matmul %0, %1, %cst {dimension_numbers = #tpu.dot_dimension_numbers<[1], [0], [0], [1], [0, 0, 1, 1], [], []>} : vector<128x36xbf16>, vector<36x128xbf16>, vector<128x128xf32> -> vector<128x128xf32>
    %c0_3 = arith.constant 0 : index
    %c0_4 = arith.constant 0 : index
    %3 = vector.load %arg3[%c0_3, %c0_4] : memref<128x128xf32, #tpu.memory_space<vmem>>, vector<128x128xf32>
    tpu.vector_store %arg3[%c0_3, %c0_4], %2 {strides = array<i32>} : memref<128x128xf32, #tpu.memory_space<vmem>>, vector<128x128xf32>,
    %cst_5 = arith.constant dense<0.000000e+00> : vector<128xf32>
    %4 = vector.multi_reduction <add>, %2, %cst_5 [0] : vector<128x128xf32> to vector<128xf32>
    %5 = vector.shape_cast %4 : vector<128xf32> to vector<1x128xf32>
    %6 = arith.mulf %2, %2 : vector<128x128xf32>
    %cst_6 = arith.constant dense<0.000000e+00> : vector<128xf32>
    %7 = vector.multi_reduction <add>, %6, %cst_6 [0] : vector<128x128xf32> to vector<128xf32>
    %8 = vector.shape_cast %7 : vector<128xf32> to vector<1x128xf32>
    %cst_7 = arith.constant 0.000000e+00 : f32
    %9 = vector.broadcast %cst_7 : f32 to vector<6x128xf32>
    %10 = tpu.concatenate %5, %8, %9 in 0 : vector<1x128xf32>, vector<1x128xf32>, vector<6x128xf32> -> vector<8x128xf32>
    %c0_8 = arith.constant 0 : index
    %c0_9 = arith.constant 0 : index
    %11 = vector.load %arg4[%c0_8, %c0_9] : memref<8x128xf32, #tpu.memory_space<vmem>>, vector<8x128xf32>
    tpu.vector_store %arg4[%c0_8, %c0_9], %10 {strides = array<i32>} : memref<8x128xf32, #tpu.memory_space<vmem>>, vector<8x128xf32>,
    return
  }
  func.func @transform_0(%arg0: i32) -> (i32, i32) {
    %c0_i32 = arith.constant 0 : i32
    %c0_i32_0 = arith.constant 0 : i32
    return %arg0, %c0_i32 : i32, i32
  }
  func.func @transform_1(%arg0: i32) -> (i32, i32) {
    %c0_i32 = arith.constant 0 : i32
    %c0_i32_0 = arith.constant 0 : i32
    %c0_i32_1 = arith.constant 0 : i32
    return %c0_i32, %c0_i32_0 : i32, i32
  }
  func.func @transform_2(%arg0: i32) -> (i32, i32) {
    %c0_i32 = arith.constant 0 : i32
    %c0_i32_0 = arith.constant 0 : i32
    return %arg0, %c0_i32 : i32, i32
  }
  func.func @transform_3(%arg0: i32) -> (i32, i32) {
    %c0_i32 = arith.constant 0 : i32
    %c0_i32_0 = arith.constant 0 : i32
    return %arg0, %c0_i32 : i32, i32
  }
}

</mosaic_0001>

<llo_original>
// kernel: tpu_custom_call.1
$region0: #{tpu_custom_call.1}
  #allocation0 [shape = 'u32[]', space=smem, size = 0x4, offset = 0x4, fixed_abs, tag = 'smem constant byte address 0x4 - core index']
  #allocation1 [shape = 'u32[144,128]{1,0:T(1,128)}', space=vmem, size = 0x12000, scoped, tag = 'internal scratch']
  %s0 = inlined_call_operand.vmem [shape: bf16[512,36], index: 0, kind: input, shape index: {}]
  %s1 = inlined_call_operand.vmem [shape: bf16[36,128], index: 1, kind: input, shape index: {}]
  %s2 = inlined_call_operand.hbm [shape: f32[512,128], index: 2, kind: output, shape index: {0}]
  %s3 = inlined_call_operand.hbm [shape: f32[32,128], index: 3, kind: output, shape index: {1}]
  %4 = xla_tuple %s2, %s3
  %s5 = sld [smem:[#allocation0]]
  $region49: #{tpu_custom_call.1} parent=0
    _
  %s7 = ssub.s32 1, %s5
  %s8 = scalar_select 0, %s7, %s5
  $region1: #{tpu_custom_call.1} parent=0
    #allocation2 [shape = 'u8[131072]{0}', space=vmem, size = 0x20000, scoped, tag = 'output window, operand 0']
    #allocation3 [shape = 's32[2]{0}', space=sflag, size = 0x8, scoped, tag = 'scoped memory for tpu_custom_call.1']
    #allocation4 [shape = 'u8[8192]{0}', space=vmem, size = 0x2000, scoped, tag = 'output window, operand 1']
    #allocation5 [shape = 's32[2]{0}', space=sflag, size = 0x8, scoped, tag = 'scoped memory for tpu_custom_call.1']
    %9 = vsyncpa [#allocation3], 0
    %s10 = scalar_lea.sflag [#allocation3], 1
    %11 = vsyncpa %s10, 0
    %12 = vsyncpa [#allocation5], 0
    %s13 = scalar_lea.sflag [#allocation5], 1
    %14 = vsyncpa %s13, 0
    loop: start=0, step=1, limit=6
    $region2: #{tpu_custom_call.1} parent=1 // loop_pre_header
      _
    $region3: #{tpu_custom_call.1} parent=1 // loop_header
      %s16 = sphi 0, %s20
      %p17 = scmp.ge.s32.totalorder %s16, 6
      %s26 = sphi 0, %s28
      %s29 = sphi 0, %s26
      %s30 = sphi 0, %s29
      %s46 = sphi 0, %s30
      %s50 = sphi 0, %s50
      %s52 = sphi 0, %s50
      %s53 = sphi 0, %s52
      %s67 = sphi 0, %s53
      %s73 = sphi 0, %s75
      %s76 = sphi 0, %s73
      %s77 = sphi 0, %s76
      %s93 = sphi 0, %s77
      %s99 = sphi 0, %s101
      %s102 = sphi 0, %s99
      %s103 = sphi 0, %s102
      %s119 = sphi 0, %s103
    $region4: #{tpu_custom_call.1} parent=1 // loop_header_branch
      %19 = sbr.rel (%p17) target = $region8
    $region5: #{tpu_custom_call.1} parent=1 // loop_body
      %s21 = ssub.s32 %s16, 1
      %s22 = ssub.s32 %s16, 2
      %s23 = sadd.s32 %s16, 1
      %s24 = ssub.s32 %s16, %s23
      %p25 = scmp.eq.s32.totalorder %s24, 0
      %s27 = sadd.s32 %s26, 1
      %s28 = scalar_select %p25, %s26, %s27
      %p31 = pneg %p25
      %p32 = scmp.eq.s32.totalorder %s16, 3
      %p33 = por %p31, %p32
      %p34 = scmp.ne.s32.totalorder %s26, %s29
      %p35 = scmp.eq.s32.totalorder %s16, 0
      %p36 = por %p34, %p35
      %p37 = scmp.ne.s32.totalorder %s26, %s29
      %p38 = scmp.eq.s32.totalorder %s21, 3
      %p39 = por %p37, %p38
      %p40 = scmp.ne.s32.totalorder %s29, %s30
      %p41 = scmp.eq.s32.totalorder %s21, 0
      %p42 = por %p40, %p41
      %p43 = scmp.ne.s32.totalorder %s29, %s30
      %p44 = scmp.eq.s32.totalorder %s22, 3
      %p45 = por %p43, %p44
      %p47 = scmp.ne.s32.totalorder %s30, %s46
      %p48 = scmp.eq.s32.totalorder %s22, 0
      %p49 = por %p47, %p48
      %s51 = sadd.s32 %s50, 1
      %p54 = scmp.eq.s32.totalorder %s16, 3
      %p55 = scmp.ne.s32.totalorder %s50, %s52
      %p56 = scmp.eq.s32.totalorder %s16, 0
      %p57 = por %p55, %p56
      %p58 = scmp.ne.s32.totalorder %s50, %s52
      %p59 = scmp.eq.s32.totalorder %s21, 3
      %p60 = por %p58, %p59
      %p61 = scmp.ne.s32.totalorder %s52, %s53
      %p62 = scmp.eq.s32.totalorder %s21, 0
      %p63 = por %p61, %p62
      %p64 = scmp.ne.s32.totalorder %s52, %s53
      %p65 = scmp.eq.s32.totalorder %s22, 3
      %p66 = por %p64, %p65
      %p68 = scmp.ne.s32.totalorder %s53, %s67
      %p69 = scmp.eq.s32.totalorder %s22, 0
      %p70 = por %p68, %p69
      %s71 = ssub.s32 %s16, %s23
      %p72 = scmp.eq.s32.totalorder %s71, 0
      %s74 = sadd.s32 %s73, 1
      %s75 = scalar_select %p72, %s73, %s74
      %p78 = pneg %p72
      %p79 = scmp.eq.s32.totalorder %s16, 3
      %p80 = por %p78, %p79
      %p81 = scmp.ne.s32.totalorder %s73, %s76
      %p82 = scmp.eq.s32.totalorder %s16, 0
      %p83 = por %p81, %p82
      %p84 = scmp.ne.s32.totalorder %s73, %s76
      %p85 = scmp.eq.s32.totalorder %s21, 3
      %p86 = por %p84, %p85
      %p87 = scmp.ne.s32.totalorder %s76, %s77
      %p88 = scmp.eq.s32.totalorder %s21, 0
      %p89 = por %p87, %p88
      %p90 = scmp.ne.s32.totalorder %s76, %s77
      %p91 = scmp.eq.s32.totalorder %s22, 3
      %p92 = por %p90, %p91
      %p94 = scmp.ne.s32.totalorder %s77, %s93
      %p95 = scmp.eq.s32.totalorder %s22, 0
      %p96 = por %p94, %p95
      %s97 = ssub.s32 %s16, %s23
      %p98 = scmp.eq.s32.totalorder %s97, 0
      %s100 = sadd.s32 %s99, 1
      %s101 = scalar_select %p98, %s99, %s100
      %p104 = pneg %p98
      %p105 = scmp.eq.s32.totalorder %s16, 3
      %p106 = por %p104, %p105
      %p107 = scmp.ne.s32.totalorder %s99, %s102
      %p108 = scmp.eq.s32.totalorder %s16, 0
      %p109 = por %p107, %p108
      %p110 = scmp.ne.s32.totalorder %s99, %s102
      %p111 = scmp.eq.s32.totalorder %s21, 3
      %p112 = por %p110, %p111
      %p113 = scmp.ne.s32.totalorder %s102, %s103
      %p114 = scmp.eq.s32.totalorder %s21, 0
      %p115 = por %p113, %p114
      %p116 = scmp.ne.s32.totalorder %s102, %s103
      %p117 = scmp.eq.s32.totalorder %s22, 3
      %p118 = por %p116, %p117
      %p120 = scmp.ne.s32.totalorder %s103, %s119
      %p121 = scmp.eq.s32.totalorder %s22, 0
      %p122 = por %p120, %p121
      %p123 = scmp.le.s32.totalorder 1, %s16
      %p124 = scmp.lt.s32.totalorder %s16, 5
      %p125 = pnand %p123, %p124
      %p126 = pneg %p125
      // Predicated region
      $region9: #{tpu_custom_call.1} parent=5 // pred_check
        _
      $region10: #{tpu_custom_call.1} parent=5 // pred_check_branch
        %128 = sbr.rel (%p125) target = $region12
      $region11: #{tpu_custom_call.1} parent=5 // pred_region
        %s129 = ssub.s32 %s16, 1
        // Predicated region
        $region13: #{tpu_custom_call.1} parent=11 // pred_check
          %p130 = pneg %p63
        $region14: #{tpu_custom_call.1} parent=11 // pred_check_branch
          %132 = sbr.rel (%p130) target = $region16
        $region15: #{tpu_custom_call.1} parent=11 // pred_region
          _
        $region16: #{tpu_custom_call.1} parent=11 // pred_fallthru
          _
      $region12: #{tpu_custom_call.1} parent=5 // pred_fallthru
        _
      %p133 = scmp.lt.s32.totalorder %s16, 4
      // Predicated region
      $region17: #{tpu_custom_call.1} parent=5 // pred_check
        %p134 = pneg %p133
      $region18: #{tpu_custom_call.1} parent=5 // pred_check_branch
        %136 = sbr.rel (%p134) target = $region20
      $region19: #{tpu_custom_call.1} parent=5 // pred_region
        // Predicated region
        $region21: #{tpu_custom_call.1} parent=19 // pred_check
          %p137 = pneg %p36
        $region22: #{tpu_custom_call.1} parent=19 // pred_check_branch
          %139 = sbr.rel (%p137) target = $region24
        $region23: #{tpu_custom_call.1} parent=19 // pred_region
          %s140 = smul.u32 16, %s16
          %p141 = scmp.lt.s32.totalorder %s140, 63
          %s142 = scalar_select %p141, %s140, 63
          %s143 = smul.addr %s142, 4
          %s144 = scalar_lea.vmem %s0, %s143
          %s145 = smul.u32 16, %s16
        $region24: #{tpu_custom_call.1} parent=19 // pred_fallthru
          _
      $region20: #{tpu_custom_call.1} parent=5 // pred_fallthru
        _
      %p146 = scmp.le.s32.totalorder 1, %s16
      %p147 = scmp.lt.s32.totalorder %s16, 5
      %p148 = pnand %p146, %p147
      %p149 = pneg %p148
      // Predicated region
      $region25: #{tpu_custom_call.1} parent=5 // pred_check
        _
      $region26: #{tpu_custom_call.1} parent=5 // pred_check_branch
        %151 = sbr.rel (%p148) target = $region28
      $region27: #{tpu_custom_call.1} parent=5 // pred_region
        %s152 = ssub.s32 %s16, 1
        %s153 = smul.u32 16, %s21
        %p154 = scmp.lt.s32.totalorder %s153, 63
        %s155 = scalar_select %p154, %s153, 63
        %s156 = smul.addr %s155, 4
        %s157 = scalar_lea.vmem %s0, %s156
        %p158 = pneg %p42
        %p159 = pneg %p39
        %p160 = pneg %p63
        %p161 = pneg %p60
        %p162 = pneg %p89
        %p163 = pneg %p86
        %s164 = sand.u32 %s76, 1
        %s165 = scalar_lea.sflag [#allocation3], %s164
        %s166 = sand.u32 %s76, 1
        %s167 = smul.addr %s166, 128
        %s168 = scalar_lea.vmem [#allocation2], %s167
        %p169 = pneg %p115
        %p170 = pneg %p112
        %s171 = sand.u32 %s102, 1
        %s172 = scalar_lea.sflag [#allocation5], %s171
        %s173 = sand.u32 %s102, 1
        %s174 = smul.addr %s173, 8
        %s175 = scalar_lea.vmem [#allocation4], %s174
        %s176 = smul.u32 16, %s21
        %p177 = scmp.lt.s32.totalorder %s176, 63
        %s178 = scalar_select %p177, %s176, 63
        %s179 = smul.addr %s178, 4
        %s180 = scalar_lea.vmem %s0, %s179
        %s181 = smul.u32 16, %s21
        %s182 = smul.u32 16, %s21
        %v184 = vld [vmem:[%s180] sm:$0xf]
        %v185 = vld [vmem:[%s180 + $0x4] sm:$0xf]
        %v186 = vld [vmem:[%s180 + $0x8] sm:$0xf]
        %v187 = vld [vmem:[%s180 + $0xc] sm:$0xf]
        %v188 = vld [vmem:[%s180 + $0x10] sm:$0xf]
        %v189 = vld [vmem:[%s180 + $0x14] sm:$0xf]
        %v190 = vld [vmem:[%s180 + $0x18] sm:$0xf]
        %v191 = vld [vmem:[%s180 + $0x1c] sm:$0xf]
        %v192 = vld [vmem:[%s180 + $0x20] sm:$0xf]
        %v193 = vld [vmem:[%s180 + $0x24] sm:$0xf]
        %v194 = vld [vmem:[%s180 + $0x28] sm:$0xf]
        %v195 = vld [vmem:[%s180 + $0x2c] sm:$0xf]
        %v196 = vld [vmem:[%s180 + $0x30] sm:$0xf]
        %v197 = vld [vmem:[%s180 + $0x34] sm:$0xf]
        %v198 = vld [vmem:[%s180 + $0x38] sm:$0xf]
        %v199 = vld [vmem:[%s180 + $0x3c] sm:$0xf]
        %v200 = vld [vmem:[%s1] sm:$0xf]
        %v201 = vld [vmem:[%s1 + $0x4] sm:$0xf]
        %v202 = vld [vmem:[%s1 + $0x8] sm:$0xf]
        %v203 = vld [vmem:[%s1 + $0xc] sm:$0xf]
        %v204 = vld [vmem:[%s1 + $0x10] sm:$0x3]
        %v221 = vunpack.c.l.b16 %v184
        %v222 = vunpack.c.l.b16 %v185
        %v223 = vunpack.c.l.b16 %v186
        %v224 = vunpack.c.l.b16 %v187
        %v225 = vunpack.c.l.b16 %v188
        %v226 = vunpack.c.l.b16 %v189
        %v227 = vunpack.c.l.b16 %v190
        %v228 = vunpack.c.l.b16 %v191
        %v229 = vunpack.c.l.b16 %v192
        %v230 = vunpack.c.l.b16 %v193
        %v231 = vunpack.c.l.b16 %v194
        %v232 = vunpack.c.l.b16 %v195
        %v233 = vunpack.c.l.b16 %v196
        %v234 = vunpack.c.l.b16 %v197
        %v235 = vunpack.c.l.b16 %v198
        %v236 = vunpack.c.l.b16 %v199
        %v237 = vpack.c.b16 %v222, %v221
        %v238 = vpack.c.b16 %v224, %v223
        %v239 = vpack.c.b16 %v226, %v225
        %v240 = vpack.c.b16 %v228, %v227
        %v241 = vpack.c.b16 %v230, %v229
        %v242 = vpack.c.b16 %v232, %v231
        %v243 = vpack.c.b16 %v234, %v233
        %v244 = vpack.c.b16 %v236, %v235
        %v250 = vunpack.c.l.b16 %v200
        %v251 = vunpack.c.l.b16 %v201
        %v252 = vunpack.c.l.b16 %v202
        %v253 = vunpack.c.l.b16 %v203
        %v254 = vunpack.c.l.b16 %v204
        %v255 = vpack.c.b16 %v251, %v250
        %v256 = vpack.c.b16 %v253, %v252
        %v257 = vpack.c.b16 %v254, %v254
        %vm260 = vcmask 293888
        %v262 = vsel %vm260, %v237, 0
        %v265 = vsel %vm260, %v238, 0
        %v268 = vsel %vm260, %v239, 0
        %v271 = vsel %vm260, %v240, 0
        %v274 = vsel %vm260, %v241, 0
        %v277 = vsel %vm260, %v242, 0
        %v280 = vsel %vm260, %v243, 0
        %v283 = vsel %vm260, %v244, 0
        %vm285 = vcmask 1041408
        %v287 = vsel %vm285, %v257, 0
        %289 = vmatprep.subr.bf16.mxu0 0
        %290 = vmatpush1.bf16.msra.mxu0 %v255
        %291 = vmatprep.subr.bf16.mxu0 0
        %292 = vmatpush1.bf16.msra.mxu0 %v256
        %293 = vmatprep.subr.bf16.mxu0 0
        %294 = vmatpush1.bf16.msra.mxu0 %v287
        %295 = vmatprep.subr.bf16.mxu0 0
        %296 = vmatpush1.bf16.msra.mxu0 0
        %297 = vmatprep.subr.bf16.mxu0 0
        %298 = vmatpush1.bf16.msra.mxu0 0
        %299 = vmatprep.subr.bf16.mxu0 0
        %300 = vmatpush1.bf16.msra.mxu0 0
        %301 = vmatprep.subr.bf16.mxu0 0
        %302 = vmatpush1.bf16.msra.mxu0 0
        %303 = vmatprep.subr.bf16.mxu0 0
        %304 = vmatpush1.bf16.msra.mxu0 0
        %305 = vmatprep.subr.bf16.mxu0 0
        %306 = vmatpush1.bf16.msra.mxu0 0
        %307 = vmatprep.subr.bf16.mxu0 0
        %308 = vmatpush1.bf16.msra.mxu0 0
        %309 = vmatprep.subr.bf16.mxu0 0
        %310 = vmatpush1.bf16.msra.mxu0 0
        %311 = vmatprep.subr.bf16.mxu0 0
        %312 = vmatpush1.bf16.msra.mxu0 0
        %313 = vmatprep.subr.bf16.mxu0 0
        %314 = vmatpush1.bf16.msra.mxu0 0
        %315 = vmatprep.subr.bf16.mxu0 0
        %316 = vmatpush1.bf16.msra.mxu0 0
        %317 = vmatprep.subr.bf16.mxu0 0
        %318 = vmatpush1.bf16.msra.mxu0 0
        %319 = vmatprep.subr.bf16.mxu0 0
        %320 = vmatpush1.bf16.msra.mxu0 0
        %321 = vmatprep.mubr.bf16.mxu0 0
        %322 = vmatmul.mubr.bf16.gmra.mrb[0].mxu0 %v262
        %v323 = vpop.f32.mrb[0].mxu0
        %v324 = vadd.f32 0.0, %v323
        %v325 = vpop.f32.mrb[0].mxu0
        %v326 = vpop.f32.mrb[0].mxu0
        %v327 = vadd.f32 0.0, %v326
        %v328 = vpop.f32.mrb[0].mxu0
        %329 = vmatprep.mubr.bf16.mxu0 0
        %330 = vmatmul.mubr.bf16.gmra.mrb[0].mxu0 %v265
        %v331 = vpop.f32.mrb[0].mxu0
        %v332 = vadd.f32 0.0, %v331
        %v333 = vpop.f32.mrb[0].mxu0
        %v334 = vpop.f32.mrb[0].mxu0
        %v335 = vadd.f32 0.0, %v334
        %v336 = vpop.f32.mrb[0].mxu0
        %337 = vmatprep.mubr.bf16.mxu0 0
        %338 = vmatmul.mubr.bf16.gmra.mrb[0].mxu0 %v268
        %v339 = vpop.f32.mrb[0].mxu0
        %v340 = vadd.f32 0.0, %v339
        %v341 = vpop.f32.mrb[0].mxu0
        %v342 = vpop.f32.mrb[0].mxu0
        %v343 = vadd.f32 0.0, %v342
        %v344 = vpop.f32.mrb[0].mxu0
        %345 = vmatprep.mubr.bf16.mxu0 0
        %346 = vmatmul.mubr.bf16.gmra.mrb[0].mxu0 %v271
        %v347 = vpop.f32.mrb[0].mxu0
        %v348 = vadd.f32 0.0, %v347
        %v349 = vpop.f32.mrb[0].mxu0
        %v350 = vpop.f32.mrb[0].mxu0
        %v351 = vadd.f32 0.0, %v350
        %v352 = vpop.f32.mrb[0].mxu0
        %353 = vmatprep.mubr.bf16.mxu0 0
        %354 = vmatmul.mubr.bf16.gmra.mrb[0].mxu0 %v274
        %v355 = vpop.f32.mrb[0].mxu0
        %v356 = vadd.f32 0.0, %v355
        %v357 = vpop.f32.mrb[0].mxu0
        %v358 = vpop.f32.mrb[0].mxu0
        %v359 = vadd.f32 0.0, %v358
        %v360 = vpop.f32.mrb[0].mxu0
        %361 = vmatprep.mubr.bf16.mxu0 0
        %362 = vmatmul.mubr.bf16.gmra.mrb[0].mxu0 %v277
        %v363 = vpop.f32.mrb[0].mxu0
        %v364 = vadd.f32 0.0, %v363
        %v365 = vpop.f32.mrb[0].mxu0
        %v366 = vpop.f32.mrb[0].mxu0
        %v367 = vadd.f32 0.0, %v366
        %v368 = vpop.f32.mrb[0].mxu0
        %369 = vmatprep.mubr.bf16.mxu0 0
        %370 = vmatmul.mubr.bf16.gmra.mrb[0].mxu0 %v280
        %v371 = vpop.f32.mrb[0].mxu0
        %v372 = vadd.f32 0.0, %v371
        %v373 = vpop.f32.mrb[0].mxu0
        %v374 = vpop.f32.mrb[0].mxu0
        %v375 = vadd.f32 0.0, %v374
        %v376 = vpop.f32.mrb[0].mxu0
        %377 = vmatprep.mubr.bf16.mxu0 0
        %378 = vmatmul.mubr.bf16.gmra.mrb[0].mxu0 %v283
        %v379 = vpop.f32.mrb[0].mxu0
        %v380 = vadd.f32 0.0, %v379
        %v381 = vpop.f32.mrb[0].mxu0
        %v382 = vpop.f32.mrb[0].mxu0
        %v383 = vadd.f32 0.0, %v382
        %v384 = vpop.f32.mrb[0].mxu0
        %385 = vdwg.mxu0
        %386 = vst [vmem:[%s168] sm:$0xff] %v324
        %387 = vst [vmem:[%s168 + $0x8] sm:$0xff] %v327
        %388 = vst [vmem:[%s168 + $0x10] sm:$0xff] %v332
        %389 = vst [vmem:[%s168 + $0x18] sm:$0xff] %v335
        %390 = vst [vmem:[%s168 + $0x20] sm:$0xff] %v340
        %391 = vst [vmem:[%s168 + $0x28] sm:$0xff] %v343
        %392 = vst [vmem:[%s168 + $0x30] sm:$0xff] %v348
        %393 = vst [vmem:[%s168 + $0x38] sm:$0xff] %v351
        %394 = vst [vmem:[%s168 + $0x40] sm:$0xff] %v356
        %395 = vst [vmem:[%s168 + $0x48] sm:$0xff] %v359
        %396 = vst [vmem:[%s168 + $0x50] sm:$0xff] %v364
        %397 = vst [vmem:[%s168 + $0x58] sm:$0xff] %v367
        %398 = vst [vmem:[%s168 + $0x60] sm:$0xff] %v372
        %399 = vst [vmem:[%s168 + $0x68] sm:$0xff] %v375
        %400 = vst [vmem:[%s168 + $0x70] sm:$0xff] %v380
        %401 = vst [vmem:[%s168 + $0x78] sm:$0xff] %v383
        %v402 = vadd.f32 %v324, %v327
        %v403 = vadd.f32 %v402, %v332
        %v404 = vadd.f32 %v403, %v335
        %v405 = vadd.f32 %v404, %v340
        %v406 = vadd.f32 %v405, %v343
        %v407 = vadd.f32 %v406, %v348
        %v408 = vadd.f32 %v407, %v351
        %v409 = vadd.f32 %v408, %v356
        %v410 = vadd.f32 %v409, %v359
        %v411 = vadd.f32 %v410, %v364
        %v412 = vadd.f32 %v411, %v367
        %v413 = vadd.f32 %v412, %v372
        %v414 = vadd.f32 %v413, %v375
        %v415 = vadd.f32 %v414, %v380
        %v416 = vadd.f32 %v415, %v383
        %v417 = vrot.slane %v416, 4
        %v418 = vadd.f32 %v416, %v417
        %v419 = vrot.slane %v418, 2
        %v420 = vadd.f32 %v418, %v419
        %v421 = vrot.slane %v420, 1
        %v422 = vadd.f32 %v420, %v421
        %v423 = vmul.f32 %v324, %v324
        %v424 = vmul.f32 %v327, %v327
        %v425 = vmul.f32 %v332, %v332
        %v426 = vmul.f32 %v335, %v335
        %v427 = vmul.f32 %v340, %v340
        %v428 = vmul.f32 %v343, %v343
        %v429 = vmul.f32 %v348, %v348
        %v430 = vmul.f32 %v351, %v351
        %v431 = vmul.f32 %v356, %v356
        %v432 = vmul.f32 %v359, %v359
        %v433 = vmul.f32 %v364, %v364
        %v434 = vmul.f32 %v367, %v367
        %v435 = vmul.f32 %v372, %v372
        %v436 = vmul.f32 %v375, %v375
        %v437 = vmul.f32 %v380, %v380
        %v438 = vmul.f32 %v383, %v383
        %v439 = vadd.f32 %v423, %v424
        %v440 = vadd.f32 %v439, %v425
        %v441 = vadd.f32 %v440, %v426
        %v442 = vadd.f32 %v441, %v427
        %v443 = vadd.f32 %v442, %v428
        %v444 = vadd.f32 %v443, %v429
        %v445 = vadd.f32 %v444, %v430
        %v446 = vadd.f32 %v445, %v431
        %v447 = vadd.f32 %v446, %v432
        %v448 = vadd.f32 %v447, %v433
        %v449 = vadd.f32 %v448, %v434
        %v450 = vadd.f32 %v449, %v435
        %v451 = vadd.f32 %v450, %v436
        %v452 = vadd.f32 %v451, %v437
        %v453 = vadd.f32 %v452, %v438
        %v454 = vrot.slane %v453, 4
        %v455 = vadd.f32 %v453, %v454
        %v456 = vrot.slane %v455, 2
        %v457 = vadd.f32 %v455, %v456
        %v458 = vrot.slane %v457, 1
        %v459 = vadd.f32 %v457, %v458
        %vm460 = vcmask 1040384
        %v461 = vsel %vm460, %v422, %v459
        %v462 = vsel %vm285, %v461, 0.0
        %463 = vst [vmem:[%s175] sm:$0xff] %v462
        %s464 = sand.u32 %s76, 1
        %s465 = scalar_lea.sflag [#allocation3], %s464
        %s466 = sand.u32 %s76, 1
        %s467 = smul.addr %s466, 128
        %s468 = scalar_lea.vmem [#allocation2], %s467
        %s469 = sand.u32 %s102, 1
        %s470 = scalar_lea.sflag [#allocation5], %s469
        %s471 = sand.u32 %s102, 1
        %s472 = smul.addr %s471, 8
        %s473 = scalar_lea.vmem [#allocation4], %s472
        // Predicated region
        $region29: #{tpu_custom_call.1} parent=27 // pred_check
          %p474 = pneg %p86
        $region30: #{tpu_custom_call.1} parent=27 // pred_check_branch
          %476 = sbr.rel (%p474) target = $region32
        $region31: #{tpu_custom_call.1} parent=27 // pred_region
          %s477 = smul.u32 16, %s21
          %s479 = ssub.s32 2048, 2048
          %480 = vsyncadd %s465, %s479
          %s481 = smul.addr %s477, 128
          %s482 = scalar_lea.hbm %s2, %s481
          %s483 = sshll.u32 %s468, 4
          %s484 = int_to_ptr.vmem [resolvable:$true] %s483
          %489 = dma.vmem_to_hbm [thread:$0]  %s484, 2048, %s482, %s465, 128, 128, 8
        $region32: #{tpu_custom_call.1} parent=27 // pred_fallthru
          _
        // Predicated region
        $region33: #{tpu_custom_call.1} parent=27 // pred_check
          %p490 = pneg %p112
        $region34: #{tpu_custom_call.1} parent=27 // pred_check_branch
          %492 = sbr.rel (%p490) target = $region36
        $region35: #{tpu_custom_call.1} parent=27 // pred_region
          %s494 = ssub.s32 128, 128
          %495 = vsyncadd %s470, %s494
          %s496 = smul.addr %s21, 128
          %s497 = scalar_lea.hbm %s3, %s496
          %s499 = sshll.u32 %s473, 4
          %s500 = int_to_ptr.vmem [resolvable:$true] %s499
          %502 = dma.vmem_to_hbm [thread:$0]  %s500, 128, %s497, %s470
        $region36: #{tpu_custom_call.1} parent=27 // pred_fallthru
          _
      $region28: #{tpu_custom_call.1} parent=5 // pred_fallthru
        _
      %p503 = scmp.le.s32.totalorder 2, %s16
      // Predicated region
      $region37: #{tpu_custom_call.1} parent=5 // pred_check
        %p504 = pneg %p503
      $region38: #{tpu_custom_call.1} parent=5 // pred_check_branch
        %506 = sbr.rel (%p504) target = $region40
      $region39: #{tpu_custom_call.1} parent=5 // pred_region
        %s507 = ssub.s32 %s16, 2
        // Predicated region
        $region41: #{tpu_custom_call.1} parent=39 // pred_check
          %p508 = pneg %p92
        $region42: #{tpu_custom_call.1} parent=39 // pred_check_branch
          %510 = sbr.rel (%p508) target = $region44
        $region43: #{tpu_custom_call.1} parent=39 // pred_region
          %s511 = sand.u32 %s77, 1
          %s512 = scalar_lea.sflag [#allocation3], %s511
          %s513 = sand.u32 %s77, 1
          %s514 = smul.addr %s513, 128
          %s515 = scalar_lea.vmem [#allocation2], %s514
          %516 = dma.done %s512, 2048
        $region44: #{tpu_custom_call.1} parent=39 // pred_fallthru
          _
        // Predicated region
        $region45: #{tpu_custom_call.1} parent=39 // pred_check
          %p517 = pneg %p118
        $region46: #{tpu_custom_call.1} parent=39 // pred_check_branch
          %519 = sbr.rel (%p517) target = $region48
        $region47: #{tpu_custom_call.1} parent=39 // pred_region
          %s520 = sand.u32 %s103, 1
          %s521 = scalar_lea.sflag [#allocation5], %s520
          %s522 = sand.u32 %s103, 1
          %s523 = smul.addr %s522, 8
          %s524 = scalar_lea.vmem [#allocation4], %s523
          %525 = dma.done %s521, 128
        $region48: #{tpu_custom_call.1} parent=39 // pred_fallthru
          _
      $region40: #{tpu_custom_call.1} parent=5 // pred_fallthru
        _
    $region6: #{tpu_custom_call.1} parent=1 // loop_footer
      %s20 = sadd.s32 1, %s16
    $region7: #{tpu_custom_call.1} parent=1 // loop_footer_branch
      %15 = sbr.rel target = $region3
    $region8: #{tpu_custom_call.1} parent=1 // loop_exit
      _
    %526 = vsyncpa [#allocation3], 1
    %s527 = scalar_lea.sflag [#allocation3], 1
    %528 = vsyncpa %s527, 1
    %529 = vsyncpa [#allocation5], 1
    %s530 = scalar_lea.sflag [#allocation5], 1
    %531 = vsyncpa %s530, 1

</llo_original>
